<compile_context>
chip_gen: v6e
topology: v6e:2x2x1
jax: 0.10.0
libtpu: 0.0.40
codegen_flags: <defaults>
</compile_context>

<pallas_src>
import math

import jax
import jax.numpy as jnp
from jax.experimental import pallas as pl
from jax.experimental.pallas import tpu as pltpu

ALPHA = 0.2
MU = 0.89
BASE = ALPHA * MU + 1.0 - ALPHA
C1 = (1.0 + ALPHA * MU - 2.0 * ALPHA) / BASE   # coefficient on A @ X
C2 = (ALPHA * MU) / BASE                       # coefficient on H
C3 = (ALPHA - ALPHA * MU) / BASE               # coefficient on A @ H
NEG_BIG = -9.0e15
NUM_HOPS = 4


def _make_kernel(k_adj, hop0_identity):
    """Per-row-tile kernel.  All structural parameters are static."""

    def kernel(*refs):
        # l_ref  : (k_adj, tn, N)    masked adjacency logits, row tile, per hop
        # yw_ref : (k_adj, N, B*O)   pre-projected aggregation RHS (resident)
        # res_ref: (k_adj, tn, B*O)  c2*(H @ W_k) + bias_k rows, f32
        # h0_ref : (tn, B*O)         precomputed hop-0 output rows (identity path)
        # o_ref  : (tn, K*B*O)       lane-dense concatenated output tile
        if hop0_identity:
            l_ref, yw_ref, res_ref, h0_ref, o_ref = refs
        else:
            l_ref, yw_ref, res_ref, o_ref = refs

        pieces = []
        if hop0_identity:
            # A_0 = softmax(masked identity) == I exactly; its full output
            # (projection + bias) was precomputed in the wrapper -> just copy.
            pieces.append(h0_ref[...])

        for k in range(k_adj):                       # static unroll (<= 4 hops)
            lk = l_ref[k]                            # (tn, N), f32 or bf16
            # Softmax statistics in f32 (no-op upcasts on the f32 path); the
            # exp itself runs in the storage dtype (bf16 EUP on v6e/v7x).
            lk32 = lk.astype(jnp.float32)
            m = jnp.max(lk32, axis=-1, keepdims=True)
            e = jnp.exp((lk32 - m).astype(lk.dtype))                # unnormalized
            s = jnp.sum(e.astype(jnp.float32), axis=-1, keepdims=True)
            # ONE aggregation matmul per hop against the pre-projected RHS.
            agg = jnp.dot(e, yw_ref[k], preferred_element_type=jnp.float32)
            # Normalize after the matmul (tn rows instead of tn*N elements):
            # EUP approx reciprocal + one Newton step (~f32 accurate).
            inv = pl.reciprocal(s, approx=True)
            inv = inv * (2.0 - s * inv)
            pieces.append(agg * inv + res_ref[k])                   # (tn, B*O)

        # Lane-dense concatenated tile, one dense store (bias already folded).
        o_ref[...] = jnp.concatenate(pieces, axis=-1).astype(o_ref.dtype)

    return kernel


def _vmem_capacity_bytes():
    try:
        return int(pltpu.get_tpu_info().vmem_capacity_bytes)
    except Exception:
        # Query unavailable: assume the smallest per-core VMEM (v7x, 64 MiB/TC).
        return 64 * 1024 * 1024


def _choose_tn(n_nodes, k_adj, logit_bytes, resident_bytes, vmem_cap,
               logits_buffers=2):
    """Largest row tile (multiple of 8, dividing N) whose streamed logits
    buffers + f32 softmax temporaries + resident slabs stay within ~60% of this
    generation's VMEM capacity.  Prefers well-aligned (multiple-of-256) tiles."""
    if n_nodes % 8 != 0:
        return n_nodes                       # tiny / irregular: single tile
    budget = max(vmem_cap * 6 // 10 - resident_bytes, vmem_cap // 8)
    per_row = n_nodes * (logits_buffers * k_adj * logit_bytes + 3 * 4)
    rows = int(budget // max(per_row, 1))
    if rows >= n_nodes:
        return n_nodes
    rows = max(8, (rows // 8) * 8)
    for align in (256, 128, 64, 32, 16, 8):
        if align > rows:
            continue
        t = (rows // align) * align
        while t >= align and n_nodes % t:
            t -= align
        if t >= align:
            return t
    return 8


def gnn_lf_forward(logits, x, h, w, bias, *, hop0_identity=False, tn=None,
                   matmul_dtype=jnp.float32, single_buffer_invariants=True,
                   logits_buffers=2):
    """
    logits : (K_adj, N, N) masked adjacency logits.  K_adj = 4, or 3 when
             hop0_identity=True (hop 0 = identity adjacency is folded in
             analytically: no softmax, no (N,N) matmul, no logits DMA).
    x, h   : (B, N, F);  w: (4, F, O);  bias: (4*O,)
    returns (B, N, 4*O)  ==  torch.cat([h_k @ W[k]], dim=2) + bias
    """
    k_adj, n_nodes, _ = logits.shape
    batch, _, feat = x.shape
    num_hops, _, out_f = w.shape
    k_off = 1 if hop0_identity else 0
    assert k_adj == num_hops - k_off, (k_adj, num_hops, hop0_identity)

    bo = batch * out_f
    ko = num_hops * bo                      # kernel-output lane width
    bytes_m = jnp.dtype(matmul_dtype).itemsize

    # ---- one-time wrapper passes (outside the grid) -------------------------
    # Logits stream in the compute dtype (bf16 halves the dominant DMA bytes).
    if logits.dtype != matmul_dtype:
        logits = logits.astype(matmul_dtype)
    # Pre-projected node-major operands: each hop becomes a single MXU matmul.
    w_used = w[k_off:]                                           # (k_adj, F, O)
    y = C1 * x + C3 * h                                          # (B, N, F)
    yw = jnp.einsum('bnf,kfo->knbo', y, w_used)
    yw = yw.reshape(k_adj, n_nodes, bo).astype(matmul_dtype)     # resident RHS
    bias_k = bias.reshape(num_hops, 1, 1, out_f).astype(jnp.float32)
    res = C2 * jnp.einsum('bnf,kfo->knbo', h, w_used) + bias_k[k_off:]
    res = res.reshape(k_adj, n_nodes, bo).astype(jnp.float32)
    if hop0_identity:
        h0 = jnp.einsum('bnf,fo->nbo', C1 * x + (C2 + C3) * h, w[0]) + bias_k[0]
        h0 = h0.reshape(n_nodes, bo).astype(jnp.float32)

    # ---- generation-aware tiling / VMEM budgets -----------------------------
    vmem_cap = _vmem_capacity_bytes()
    yw_bufs = 1 if single_buffer_invariants else 2
    resident = yw_bufs * k_adj * n_nodes * bo * bytes_m
    if tn is None:
        tn = _choose_tn(n_nodes, k_adj, bytes_m, resident, vmem_cap,
                        logits_buffers)
    assert n_nodes % tn == 0, (n_nodes, tn)

    kernel = _make_kernel(k_adj, hop0_identity)

    vmem_est = (logits_buffers * k_adj * tn * n_nodes * bytes_m   # logits stream
                + 3 * tn * n_nodes * 4                            # f32 exp temps
                + resident                                        # yW slab
                + 2 * k_adj * tn * bo * 4                         # res tiles
                + (2 * tn * bo * 4 if hop0_identity else 0)       # hop-0 tiles
                + 3 * tn * ko * 4)                                # out tiles+concat
    cp_kwargs = dict(dimension_semantics=("parallel",))
    if vmem_est > 12 * 1024 * 1024:        # below v5e's 16 MiB scoped default
        cp_kwargs["vmem_limit_bytes"] = int(
            min(vmem_cap * 7 // 8, vmem_est + (vmem_cap >> 3)))
    compiler_params = pltpu.CompilerParams(**cp_kwargs)

    def _call(single_buffer):
        inv_kw = {"pipeline_mode": pl.Buffered(1)} if single_buffer else {}
        log_kw = ({"pipeline_mode": pl.Buffered(logits_buffers)}
                  if logits_buffers != 2 else {})
        in_specs = [
            pl.BlockSpec((k_adj, tn, n_nodes), lambda i: (0, i, 0), **log_kw),
            # Grid-invariant resident RHS: single buffer — double-buffering a
            # constant-index operand only wastes VMEM.
            pl.BlockSpec((k_adj, n_nodes, bo), lambda i: (0, 0, 0), **inv_kw),
            pl.BlockSpec((k_adj, tn, bo), lambda i: (0, i, 0)),
        ]
        args = [logits, yw, res]
        if hop0_identity:
            in_specs.append(pl.BlockSpec((tn, bo), lambda i: (i, 0)))
            args.append(h0)
        return pl.pallas_call(
            kernel,
            out_shape=jax.ShapeDtypeStruct((n_nodes, ko), jnp.float32),
            grid=(n_nodes // tn,),
            in_specs=in_specs,
            out_specs=pl.BlockSpec((tn, ko), lambda i: (i, 0)),
            compiler_params=compiler_params,
        )(*args)

    if single_buffer_invariants:
        try:
            out_nm = _call(True)
        except Exception:
            # This Pallas build rejects Buffered(1): fall back to the default
            # double-buffered invariant operand (correct, slightly more VMEM).
            out_nm = _call(False)
    else:
        out_nm = _call(False)

    # Node-major (N, K*B*O), intra-row order [hop, batch, out] -> (B, N, K*O).
    return (out_nm.reshape(n_nodes, num_hops, batch, out_f)
            .transpose(2, 0, 1, 3)
            .reshape(batch, n_nodes, num_hops * out_f))


def gnn_lf_reference(logits_full, x, h, w, bias):
    """Pure-JAX reference (module semantics, f32, exact softmax)."""
    a = jax.nn.softmax(logits_full, axis=-1)                    # (4, N, N)
    outs = []
    for k in range(logits_full.shape[0]):
        hk = (C1 * jnp.einsum('ij,bjf->bif', a[k], x)
              + C2 * h
              + C3 * jnp.einsum('ij,bjf->bif', a[k], h))
        outs.append(jnp.einsum('bnf,fo->bno', hk, w[k]))
    return jnp.concatenate(outs, axis=2) + bias.reshape(1, 1, -1)


if __name__ == "__main__":
    # Small deterministic problem: N=16 nodes, in_features=8, out_features=4, batch=2.
    B, N, F_IN, F_OUT = 2, 16, 8, 4
    key = jax.random.PRNGKey(0)
    k_adj, k_x, k_h, k_w, k_b = jax.random.split(key, 5)

    # Deterministic adjacency with self loops (no empty rows in hop 1).
    adj = (jax.random.uniform(k_adj, (N, N)) > 0.6).astype(jnp.float32)
    adj = jnp.minimum(adj + jnp.eye(N, dtype=jnp.float32), 1.0)

    # adj powers, as in __init__ (adj_0 = I, adj_1 = adj, adj_2 = adj@adj, adj_3 = adj_2@adj)
    adj_0 = jnp.eye(N, dtype=jnp.float32)
    adj_1 = adj
    adj_2 = adj_1 @ adj
    adj_3 = adj_2 @ adj

    # e_k parameters initialized to 1 -> masked logit matrices.
    def mask_logits(a_mat):
        return jnp.where(a_mat > 0, 1.0, NEG_BIG).astype(jnp.float32)

    logits_all = jnp.stack([mask_logits(adj_0), mask_logits(adj_1),
                            mask_logits(adj_2), mask_logits(adj_3)], axis=0)  # (4, N, N)

    # W: (4, in_features, out_features), xavier_uniform(gain=1.414)
    fan_in, fan_out = F_IN * F_OUT, 4 * F_OUT
    bound = 1.414 * math.sqrt(6.0 / (fan_in + fan_out))
    W = jax.random.uniform(k_w, (4, F_IN, F_OUT), minval=-bound, maxval=bound,
                           dtype=jnp.float32)

    # bias: (4*out_features,), uniform(-stdv, stdv), stdv = 1/sqrt(out_features)
    stdv = 1.0 / math.sqrt(F_OUT)
    bias = jax.random.uniform(k_b, (4 * F_OUT,), minval=-stdv, maxval=stdv,
                              dtype=jnp.float32)

    x = jax.random.normal(k_x, (B, N, F_IN), dtype=jnp.float32)
    H = jax.random.normal(k_h, (B, N, F_IN), dtype=jnp.float32)

    ref = gnn_lf_reference(logits_all, x, H, W, bias)

    # 1) Optimized path: hop-0 identity shortcut (only hops 1..3 logits are read),
    #    auto row-tile size, f32 softmax + matmuls.
    out_opt = gnn_lf_forward(logits_all[1:], x, H, W, bias, hop0_identity=True)
    out_opt = jax.block_until_ready(out_opt)
    assert out_opt.shape == (B, N, 4 * F_OUT), out_opt.shape
    assert jnp.allclose(out_opt, ref, atol=1e-4, rtol=1e-4), "mismatch (hop0-identity path)"

    # 2) Generic path: all 4 hops through the softmax, 2-step row-tiled grid (tn=8).
    out_gen = gnn_lf_forward(logits_all, x, H, W, bias, hop0_identity=False, tn=8)
    out_gen = jax.block_until_ready(out_gen)
    assert jnp.allclose(out_gen, ref, atol=1e-4, rtol=1e-4), "mismatch (generic path)"

    # 3) bf16 fast path (v6e/v7x recommendation): bf16 logits stream + bf16 exp +
    #    bf16 MXU with f32 accumulation; looser tolerance due to bf16 rounding.
    out_bf16 = gnn_lf_forward(logits_all[1:], x, H, W, bias, hop0_identity=True,
                              matmul_dtype=jnp.bfloat16)
    out_bf16 = jax.block_until_ready(out_bf16)
    assert jnp.allclose(out_bf16, ref, atol=5e-2, rtol=5e-2), "mismatch (bf16 path)"

    print("KERNEL_OK")
</pallas_src>

<mosaic_0001>
module attributes {stable_mosaic.version = 11 : i64} {
  func.func @kernel(%arg0: i32, %arg1: memref<3x16x16xf32, #tpu.memory_space<vmem>>, %arg2: memref<3x16x8xf32, #tpu.memory_space<vmem>>, %arg3: memref<3x16x8xf32, #tpu.memory_space<vmem>>, %arg4: memref<16x8xf32, #tpu.memory_space<vmem>>, %arg5: memref<16x32xf32, #tpu.memory_space<vmem>>) attributes {dimension_semantics = [#tpu.dimension_semantics<parallel>], iteration_bounds = array<i64: 1>, scalar_prefetch = 0 : i64, scratch_operands = 0 : i64, tpu.core_type = #tpu.core_type<tc>, window_params = [{transform_indices = @transform_0, window_bounds = array<i64: 3, 16, 16>}, {pipeline_mode = #tpu.pipeline_mode<synchronous>, transform_indices = @transform_1, window_bounds = array<i64: 3, 16, 8>}, {transform_indices = @transform_2, window_bounds = array<i64: 3, 16, 8>}, {transform_indices = @transform_3, window_bounds = array<i64: 16, 8>}, {transform_indices = @transform_4, window_bounds = array<i64: 16, 32>}]} {
    %c0 = arith.constant 0 : index
    %c0_0 = arith.constant 0 : index
    %0 = vector.load %arg4[%c0, %c0_0] : memref<16x8xf32, #tpu.memory_space<vmem>>, vector<16x8xf32>
    %c0_1 = arith.constant 0 : index
    %c0_2 = arith.constant 0 : index
    %c0_3 = arith.constant 0 : index
    %1 = vector.load %arg1[%c0_1, %c0_2, %c0_3] : memref<3x16x16xf32, #tpu.memory_space<vmem>>, vector<1x16x16xf32>
    %2 = vector.shape_cast %1 : vector<1x16x16xf32> to vector<16x16xf32>
    %cst = arith.constant dense<0xFF800000> : vector<16xf32>
    %3 = vector.multi_reduction <maximumf>, %2, %cst [1] : vector<16x16xf32> to vector<16xf32>
    %4 = vector.shape_cast %3 : vector<16xf32> to vector<16x1xf32>
    %5 = vector.broadcast %4 : vector<16x1xf32> to vector<16x16xf32>
    %6 = arith.subf %2, %5 : vector<16x16xf32>
    %7 = math.exp %6 : vector<16x16xf32>
    %cst_4 = arith.constant dense<0.000000e+00> : vector<16xf32>
    %8 = vector.multi_reduction <add>, %7, %cst_4 [1] : vector<16x16xf32> to vector<16xf32>
    %9 = vector.shape_cast %8 : vector<16xf32> to vector<16x1xf32>
    %c0_5 = arith.constant 0 : index
    %c0_6 = arith.constant 0 : index
    %c0_7 = arith.constant 0 : index
    %10 = vector.load %arg2[%c0_5, %c0_6, %c0_7] : memref<3x16x8xf32, #tpu.memory_space<vmem>>, vector<1x16x8xf32>
    %11 = vector.shape_cast %10 : vector<1x16x8xf32> to vector<16x8xf32>
    %cst_8 = arith.constant dense<0.000000e+00> : vector<16x8xf32>
    %12 = tpu.matmul %7, %11, %cst_8 {dimension_numbers = #tpu.dot_dimension_numbers<[1], [0], [0], [1], [0, 0, 1, 1], [], []>} : vector<16x16xf32>, vector<16x8xf32>, vector<16x8xf32> -> vector<16x8xf32>
    %13 = tpu.reciprocal %9 {approx = true} : vector<16x1xf32> -> vector<16x1xf32>
    %14 = arith.mulf %9, %13 : vector<16x1xf32>
    %cst_9 = arith.constant 2.000000e+00 : f32
    %15 = vector.broadcast %cst_9 : f32 to vector<16x1xf32>
    %16 = arith.subf %15, %14 : vector<16x1xf32>
    %17 = arith.mulf %13, %16 : vector<16x1xf32>
    %18 = vector.broadcast %17 : vector<16x1xf32> to vector<16x8xf32>
    %19 = arith.mulf %12, %18 : vector<16x8xf32>
    %c0_10 = arith.constant 0 : index
    %c0_11 = arith.constant 0 : index
    %c0_12 = arith.constant 0 : index
    %20 = vector.load %arg3[%c0_10, %c0_11, %c0_12] : memref<3x16x8xf32, #tpu.memory_space<vmem>>, vector<1x16x8xf32>
    %21 = vector.shape_cast %20 : vector<1x16x8xf32> to vector<16x8xf32>
    %22 = arith.addf %19, %21 : vector<16x8xf32>
    %c1 = arith.constant 1 : index
    %c0_13 = arith.constant 0 : index
    %c0_14 = arith.constant 0 : index
    %23 = vector.load %arg1[%c1, %c0_13, %c0_14] : memref<3x16x16xf32, #tpu.memory_space<vmem>>, vector<1x16x16xf32>
    %24 = vector.shape_cast %23 : vector<1x16x16xf32> to vector<16x16xf32>
    %cst_15 = arith.constant dense<0xFF800000> : vector<16xf32>
    %25 = vector.multi_reduction <maximumf>, %24, %cst_15 [1] : vector<16x16xf32> to vector<16xf32>
    %26 = vector.shape_cast %25 : vector<16xf32> to vector<16x1xf32>
    %27 = vector.broadcast %26 : vector<16x1xf32> to vector<16x16xf32>
    %28 = arith.subf %24, %27 : vector<16x16xf32>
    %29 = math.exp %28 : vector<16x16xf32>
    %cst_16 = arith.constant dense<0.000000e+00> : vector<16xf32>
    %30 = vector.multi_reduction <add>, %29, %cst_16 [1] : vector<16x16xf32> to vector<16xf32>
    %31 = vector.shape_cast %30 : vector<16xf32> to vector<16x1xf32>
    %c1_17 = arith.constant 1 : index
    %c0_18 = arith.constant 0 : index
    %c0_19 = arith.constant 0 : index
    %32 = vector.load %arg2[%c1_17, %c0_18, %c0_19] : memref<3x16x8xf32, #tpu.memory_space<vmem>>, vector<1x16x8xf32>
    %33 = vector.shape_cast %32 : vector<1x16x8xf32> to vector<16x8xf32>
    %cst_20 = arith.constant dense<0.000000e+00> : vector<16x8xf32>
    %34 = tpu.matmul %29, %33, %cst_20 {dimension_numbers = #tpu.dot_dimension_numbers<[1], [0], [0], [1], [0, 0, 1, 1], [], []>} : vector<16x16xf32>, vector<16x8xf32>, vector<16x8xf32> -> vector<16x8xf32>
    %35 = tpu.reciprocal %31 {approx = true} : vector<16x1xf32> -> vector<16x1xf32>
    %36 = arith.mulf %31, %35 : vector<16x1xf32>
    %cst_21 = arith.constant 2.000000e+00 : f32
    %37 = vector.broadcast %cst_21 : f32 to vector<16x1xf32>
    %38 = arith.subf %37, %36 : vector<16x1xf32>
    %39 = arith.mulf %35, %38 : vector<16x1xf32>
    %40 = vector.broadcast %39 : vector<16x1xf32> to vector<16x8xf32>
    %41 = arith.mulf %34, %40 : vector<16x8xf32>
    %c1_22 = arith.constant 1 : index
    %c0_23 = arith.constant 0 : index
    %c0_24 = arith.constant 0 : index
    %42 = vector.load %arg3[%c1_22, %c0_23, %c0_24] : memref<3x16x8xf32, #tpu.memory_space<vmem>>, vector<1x16x8xf32>
    %43 = vector.shape_cast %42 : vector<1x16x8xf32> to vector<16x8xf32>
    %44 = arith.addf %41, %43 : vector<16x8xf32>
    %c2 = arith.constant 2 : index
    %c0_25 = arith.constant 0 : index
    %c0_26 = arith.constant 0 : index
    %45 = vector.load %arg1[%c2, %c0_25, %c0_26] : memref<3x16x16xf32, #tpu.memory_space<vmem>>, vector<1x16x16xf32>
    %46 = vector.shape_cast %45 : vector<1x16x16xf32> to vector<16x16xf32>
    %cst_27 = arith.constant dense<0xFF800000> : vector<16xf32>
    %47 = vector.multi_reduction <maximumf>, %46, %cst_27 [1] : vector<16x16xf32> to vector<16xf32>
    %48 = vector.shape_cast %47 : vector<16xf32> to vector<16x1xf32>
    %49 = vector.broadcast %48 : vector<16x1xf32> to vector<16x16xf32>
    %50 = arith.subf %46, %49 : vector<16x16xf32>
    %51 = math.exp %50 : vector<16x16xf32>
    %cst_28 = arith.constant dense<0.000000e+00> : vector<16xf32>
    %52 = vector.multi_reduction <add>, %51, %cst_28 [1] : vector<16x16xf32> to vector<16xf32>
    %53 = vector.shape_cast %52 : vector<16xf32> to vector<16x1xf32>
    %c2_29 = arith.constant 2 : index
    %c0_30 = arith.constant 0 : index
    %c0_31 = arith.constant 0 : index
    %54 = vector.load %arg2[%c2_29, %c0_30, %c0_31] : memref<3x16x8xf32, #tpu.memory_space<vmem>>, vector<1x16x8xf32>
    %55 = vector.shape_cast %54 : vector<1x16x8xf32> to vector<16x8xf32>
    %cst_32 = arith.constant dense<0.000000e+00> : vector<16x8xf32>
    %56 = tpu.matmul %51, %55, %cst_32 {dimension_numbers = #tpu.dot_dimension_numbers<[1], [0], [0], [1], [0, 0, 1, 1], [], []>} : vector<16x16xf32>, vector<16x8xf32>, vector<16x8xf32> -> vector<16x8xf32>
    %57 = tpu.reciprocal %53 {approx = true} : vector<16x1xf32> -> vector<16x1xf32>
    %58 = arith.mulf %53, %57 : vector<16x1xf32>
    %cst_33 = arith.constant 2.000000e+00 : f32
    %59 = vector.broadcast %cst_33 : f32 to vector<16x1xf32>
    %60 = arith.subf %59, %58 : vector<16x1xf32>
    %61 = arith.mulf %57, %60 : vector<16x1xf32>
    %62 = vector.broadcast %61 : vector<16x1xf32> to vector<16x8xf32>
    %63 = arith.mulf %56, %62 : vector<16x8xf32>
    %c2_34 = arith.constant 2 : index
    %c0_35 = arith.constant 0 : index
    %c0_36 = arith.constant 0 : index
    %64 = vector.load %arg3[%c2_34, %c0_35, %c0_36] : memref<3x16x8xf32, #tpu.memory_space<vmem>>, vector<1x16x8xf32>
    %65 = vector.shape_cast %64 : vector<1x16x8xf32> to vector<16x8xf32>
    %66 = arith.addf %63, %65 : vector<16x8xf32>
    %67 = tpu.concatenate %0, %22, %44, %66 in 1 : vector<16x8xf32>, vector<16x8xf32>, vector<16x8xf32>, vector<16x8xf32> -> vector<16x32xf32>
    %c0_37 = arith.constant 0 : index
    %c0_38 = arith.constant 0 : index
    %68 = vector.load %arg5[%c0_37, %c0_38] : memref<16x32xf32, #tpu.memory_space<vmem>>, vector<16x32xf32>
    tpu.vector_store %arg5[%c0_37, %c0_38], %67 {strides = array<i32>} : memref<16x32xf32, #tpu.memory_space<vmem>>, vector<16x32xf32>,
    return
  }
  func.func @transform_0(%arg0: i32) -> (i32, i32, i32) {
    %c0_i32 = arith.constant 0 : i32
    %c0_i32_0 = arith.constant 0 : i32
    %c0_i32_1 = arith.constant 0 : i32
    return %c0_i32, %arg0, %c0_i32_0 : i32, i32, i32
  }
  func.func @transform_1(%arg0: i32) -> (i32, i32, i32) {
    %c0_i32 = arith.constant 0 : i32
    %c0_i32_0 = arith.constant 0 : i32
    %c0_i32_1 = arith.constant 0 : i32
    %c0_i32_2 = arith.constant 0 : i32
    return %c0_i32, %c0_i32_0, %c0_i32_1 : i32, i32, i32
  }
  func.func @transform_2(%arg0: i32) -> (i32, i32, i32) {
    %c0_i32 = arith.constant 0 : i32
    %c0_i32_0 = arith.constant 0 : i32
    %c0_i32_1 = arith.constant 0 : i32
    return %c0_i32, %arg0, %c0_i32_0 : i32, i32, i32
  }
  func.func @transform_3(%arg0: i32) -> (i32, i32) {
    %c0_i32 = arith.constant 0 : i32
    %c0_i32_0 = arith.constant 0 : i32
    return %arg0, %c0_i32 : i32, i32
  }
  func.func @transform_4(%arg0: i32) -> (i32, i32) {
    %c0_i32 = arith.constant 0 : i32
    %c0_i32_0 = arith.constant 0 : i32
    return %arg0, %c0_i32 : i32, i32
  }
}

module attributes {stable_mosaic.version = 11 : i64} {
  func.func @kernel(%arg0: i32, %arg1: memref<3x16x16xf32, #tpu.memory_space<vmem>>, %arg2: memref<3x16x8xf32, #tpu.memory_space<vmem>>, %arg3: memref<3x16x8xf32, #tpu.memory_space<vmem>>, %arg4: memref<16x8xf32, #tpu.memory_space<vmem>>, %arg5: memref<16x32xf32, #tpu.memory_space<vmem>>) attributes {dimension_semantics = [#tpu.dimension_semantics<parallel>], iteration_bounds = array<i64: 1>, scalar_prefetch = 0 : i64, scratch_operands = 0 : i64, tpu.core_type = #tpu.core_type<tc>, window_params = [{transform_indices = @transform_0, window_bounds = array<i64: 3, 16, 16>}, {pipeline_mode = #tpu.pipeline_mode<synchronous>, transform_indices = @transform_1, window_bounds = array<i64: 3, 16, 8>}, {transform_indices = @transform_2, window_bounds = array<i64: 3, 16, 8>}, {transform_indices = @transform_3, window_bounds = array<i64: 16, 8>}, {transform_indices = @transform_4, window_bounds = array<i64: 16, 32>}]} {
    %c0 = arith.constant 0 : index
    %c0_0 = arith.constant 0 : index
    %0 = vector.load %arg4[%c0, %c0_0] : memref<16x8xf32, #tpu.memory_space<vmem>>, vector<16x8xf32>
    %c0_1 = arith.constant 0 : index
    %c0_2 = arith.constant 0 : index
    %c0_3 = arith.constant 0 : index
    %1 = vector.load %arg1[%c0_1, %c0_2, %c0_3] : memref<3x16x16xf32, #tpu.memory_space<vmem>>, vector<1x16x16xf32>
    %2 = vector.shape_cast %1 : vector<1x16x16xf32> to vector<16x16xf32>
    %cst = arith.constant dense<0xFF800000> : vector<16xf32>
    %3 = vector.multi_reduction <maximumf>, %2, %cst [1] : vector<16x16xf32> to vector<16xf32>
    %4 = vector.shape_cast %3 : vector<16xf32> to vector<16x1xf32>
    %5 = vector.broadcast %4 : vector<16x1xf32> to vector<16x16xf32>
    %6 = arith.subf %2, %5 : vector<16x16xf32>
    %7 = math.exp %6 : vector<16x16xf32>
    %cst_4 = arith.constant dense<0.000000e+00> : vector<16xf32>
    %8 = vector.multi_reduction <add>, %7, %cst_4 [1] : vector<16x16xf32> to vector<16xf32>
    %9 = vector.shape_cast %8 : vector<16xf32> to vector<16x1xf32>
    %c0_5 = arith.constant 0 : index
    %c0_6 = arith.constant 0 : index
    %c0_7 = arith.constant 0 : index
    %10 = vector.load %arg2[%c0_5, %c0_6, %c0_7] : memref<3x16x8xf32, #tpu.memory_space<vmem>>, vector<1x16x8xf32>
    %11 = vector.shape_cast %10 : vector<1x16x8xf32> to vector<16x8xf32>
    %cst_8 = arith.constant dense<0.000000e+00> : vector<16x8xf32>
    %12 = tpu.matmul %7, %11, %cst_8 {dimension_numbers = #tpu.dot_dimension_numbers<[1], [0], [0], [1], [0, 0, 1, 1], [], []>} : vector<16x16xf32>, vector<16x8xf32>, vector<16x8xf32> -> vector<16x8xf32>
    %13 = tpu.reciprocal %9 {approx = true} : vector<16x1xf32> -> vector<16x1xf32>
    %14 = arith.mulf %9, %13 : vector<16x1xf32>
    %cst_9 = arith.constant 2.000000e+00 : f32
    %15 = vector.broadcast %cst_9 : f32 to vector<16x1xf32>
    %16 = arith.subf %15, %14 : vector<16x1xf32>
    %17 = arith.mulf %13, %16 : vector<16x1xf32>
    %18 = vector.broadcast %17 : vector<16x1xf32> to vector<16x8xf32>
    %19 = arith.mulf %12, %18 : vector<16x8xf32>
    %c0_10 = arith.constant 0 : index
    %c0_11 = arith.constant 0 : index
    %c0_12 = arith.constant 0 : index
    %20 = vector.load %arg3[%c0_10, %c0_11, %c0_12] : memref<3x16x8xf32, #tpu.memory_space<vmem>>, vector<1x16x8xf32>
    %21 = vector.shape_cast %20 : vector<1x16x8xf32> to vector<16x8xf32>
    %22 = arith.addf %19, %21 : vector<16x8xf32>
    %c1 = arith.constant 1 : index
    %c0_13 = arith.constant 0 : index
    %c0_14 = arith.constant 0 : index
    %23 = vector.load %arg1[%c1, %c0_13, %c0_14] : memref<3x16x16xf32, #tpu.memory_space<vmem>>, vector<1x16x16xf32>
    %24 = vector.shape_cast %23 : vector<1x16x16xf32> to vector<16x16xf32>
    %cst_15 = arith.constant dense<0xFF800000> : vector<16xf32>
    %25 = vector.multi_reduction <maximumf>, %24, %cst_15 [1] : vector<16x16xf32> to vector<16xf32>
    %26 = vector.shape_cast %25 : vector<16xf32> to vector<16x1xf32>
    %27 = vector.broadcast %26 : vector<16x1xf32> to vector<16x16xf32>
    %28 = arith.subf %24, %27 : vector<16x16xf32>
    %29 = math.exp %28 : vector<16x16xf32>
    %cst_16 = arith.constant dense<0.000000e+00> : vector<16xf32>
    %30 = vector.multi_reduction <add>, %29, %cst_16 [1] : vector<16x16xf32> to vector<16xf32>
    %31 = vector.shape_cast %30 : vector<16xf32> to vector<16x1xf32>
    %c1_17 = arith.constant 1 : index
    %c0_18 = arith.constant 0 : index
    %c0_19 = arith.constant 0 : index
    %32 = vector.load %arg2[%c1_17, %c0_18, %c0_19] : memref<3x16x8xf32, #tpu.memory_space<vmem>>, vector<1x16x8xf32>
    %33 = vector.shape_cast %32 : vector<1x16x8xf32> to vector<16x8xf32>
    %cst_20 = arith.constant dense<0.000000e+00> : vector<16x8xf32>
    %34 = tpu.matmul %29, %33, %cst_20 {dimension_numbers = #tpu.dot_dimension_numbers<[1], [0], [0], [1], [0, 0, 1, 1], [], []>} : vector<16x16xf32>, vector<16x8xf32>, vector<16x8xf32> -> vector<16x8xf32>
    %35 = tpu.reciprocal %31 {approx = true} : vector<16x1xf32> -> vector<16x1xf32>
    %36 = arith.mulf %31, %35 : vector<16x1xf32>
    %cst_21 = arith.constant 2.000000e+00 : f32
    %37 = vector.broadcast %cst_21 : f32 to vector<16x1xf32>
    %38 = arith.subf %37, %36 : vector<16x1xf32>
    %39 = arith.mulf %35, %38 : vector<16x1xf32>
    %40 = vector.broadcast %39 : vector<16x1xf32> to vector<16x8xf32>
    %41 = arith.mulf %34, %40 : vector<16x8xf32>
    %c1_22 = arith.constant 1 : index
    %c0_23 = arith.constant 0 : index
    %c0_24 = arith.constant 0 : index
    %42 = vector.load %arg3[%c1_22, %c0_23, %c0_24] : memref<3x16x8xf32, #tpu.memory_space<vmem>>, vector<1x16x8xf32>
    %43 = vector.shape_cast %42 : vector<1x16x8xf32> to vector<16x8xf32>
    %44 = arith.addf %41, %43 : vector<16x8xf32>
    %c2 = arith.constant 2 : index
    %c0_25 = arith.constant 0 : index
    %c0_26 = arith.constant 0 : index
    %45 = vector.load %arg1[%c2, %c0_25, %c0_26] : memref<3x16x16xf32, #tpu.memory_space<vmem>>, vector<1x16x16xf32>
    %46 = vector.shape_cast %45 : vector<1x16x16xf32> to vector<16x16xf32>
    %cst_27 = arith.constant dense<0xFF800000> : vector<16xf32>
    %47 = vector.multi_reduction <maximumf>, %46, %cst_27 [1] : vector<16x16xf32> to vector<16xf32>
    %48 = vector.shape_cast %47 : vector<16xf32> to vector<16x1xf32>
    %49 = vector.broadcast %48 : vector<16x1xf32> to vector<16x16xf32>
    %50 = arith.subf %46, %49 : vector<16x16xf32>
    %51 = math.exp %50 : vector<16x16xf32>
    %cst_28 = arith.constant dense<0.000000e+00> : vector<16xf32>
    %52 = vector.multi_reduction <add>, %51, %cst_28 [1] : vector<16x16xf32> to vector<16xf32>
    %53 = vector.shape_cast %52 : vector<16xf32> to vector<16x1xf32>
    %c2_29 = arith.constant 2 : index
    %c0_30 = arith.constant 0 : index
    %c0_31 = arith.constant 0 : index
    %54 = vector.load %arg2[%c2_29, %c0_30, %c0_31] : memref<3x16x8xf32, #tpu.memory_space<vmem>>, vector<1x16x8xf32>
    %55 = vector.shape_cast %54 : vector<1x16x8xf32> to vector<16x8xf32>
    %cst_32 = arith.constant dense<0.000000e+00> : vector<16x8xf32>
    %56 = tpu.matmul %51, %55, %cst_32 {dimension_numbers = #tpu.dot_dimension_numbers<[1], [0], [0], [1], [0, 0, 1, 1], [], []>} : vector<16x16xf32>, vector<16x8xf32>, vector<16x8xf32> -> vector<16x8xf32>
    %57 = tpu.reciprocal %53 {approx = true} : vector<16x1xf32> -> vector<16x1xf32>
    %58 = arith.mulf %53, %57 : vector<16x1xf32>
    %cst_33 = arith.constant 2.000000e+00 : f32
    %59 = vector.broadcast %cst_33 : f32 to vector<16x1xf32>
    %60 = arith.subf %59, %58 : vector<16x1xf32>
    %61 = arith.mulf %57, %60 : vector<16x1xf32>
    %62 = vector.broadcast %61 : vector<16x1xf32> to vector<16x8xf32>
    %63 = arith.mulf %56, %62 : vector<16x8xf32>
    %c2_34 = arith.constant 2 : index
    %c0_35 = arith.constant 0 : index
    %c0_36 = arith.constant 0 : index
    %64 = vector.load %arg3[%c2_34, %c0_35, %c0_36] : memref<3x16x8xf32, #tpu.memory_space<vmem>>, vector<1x16x8xf32>
    %65 = vector.shape_cast %64 : vector<1x16x8xf32> to vector<16x8xf32>
    %66 = arith.addf %63, %65 : vector<16x8xf32>
    %67 = tpu.concatenate %0, %22, %44, %66 in 1 : vector<16x8xf32>, vector<16x8xf32>, vector<16x8xf32>, vector<16x8xf32> -> vector<16x32xf32>
    %c0_37 = arith.constant 0 : index
    %c0_38 = arith.constant 0 : index
    %68 = vector.load %arg5[%c0_37, %c0_38] : memref<16x32xf32, #tpu.memory_space<vmem>>, vector<16x32xf32>
    tpu.vector_store %arg5[%c0_37, %c0_38], %67 {strides = array<i32>} : memref<16x32xf32, #tpu.memory_space<vmem>>, vector<16x32xf32>,
    return
  }
  func.func @transform_0(%arg0: i32) -> (i32, i32, i32) {
    %c0_i32 = arith.constant 0 : i32
    %c0_i32_0 = arith.constant 0 : i32
    %c0_i32_1 = arith.constant 0 : i32
    return %c0_i32, %arg0, %c0_i32_0 : i32, i32, i32
  }
  func.func @transform_1(%arg0: i32) -> (i32, i32, i32) {
    %c0_i32 = arith.constant 0 : i32
    %c0_i32_0 = arith.constant 0 : i32
    %c0_i32_1 = arith.constant 0 : i32
    %c0_i32_2 = arith.constant 0 : i32
    return %c0_i32, %c0_i32_0, %c0_i32_1 : i32, i32, i32
  }
  func.func @transform_2(%arg0: i32) -> (i32, i32, i32) {
    %c0_i32 = arith.constant 0 : i32
    %c0_i32_0 = arith.constant 0 : i32
    %c0_i32_1 = arith.constant 0 : i32
    return %c0_i32, %arg0, %c0_i32_0 : i32, i32, i32
  }
  func.func @transform_3(%arg0: i32) -> (i32, i32) {
    %c0_i32 = arith.constant 0 : i32
    %c0_i32_0 = arith.constant 0 : i32
    return %arg0, %c0_i32 : i32, i32
  }
  func.func @transform_4(%arg0: i32) -> (i32, i32) {
    %c0_i32 = arith.constant 0 : i32
    %c0_i32_0 = arith.constant 0 : i32
    return %arg0, %c0_i32 : i32, i32
  }
}

</mosaic_0001>

<llo_original>
// kernel: tpu_custom_call.1
$region0: #{tpu_custom_call.1}
  #allocation0 [shape = 'u32[]', space=smem, size = 0x4, offset = 0x4, fixed_abs, tag = 'smem constant byte address 0x4 - core index']
  #allocation1 [shape = 'u32[144,128]{1,0:T(1,128)}', space=vmem, size = 0x12000, scoped, tag = 'internal scratch']
  %s0 = inlined_call_operand.vmem [shape: f32[3,16,16], index: 0, kind: input, shape index: {}]
  %s1 = inlined_call_operand.vmem [shape: f32[3,16,8], index: 1, kind: input, shape index: {}]
  %s2 = inlined_call_operand.vmem [shape: f32[3,16,8], index: 2, kind: input, shape index: {}]
  %s3 = inlined_call_operand.vmem [shape: f32[16,8], index: 3, kind: input, shape index: {}]
  %s4 = inlined_call_operand.hbm [shape: f32[16,32], index: 4, kind: output, shape index: {}]
  %s5 = sld [smem:[#allocation0]]
  $region26: #{tpu_custom_call.1} parent=0
    _
  %s7 = ssub.s32 1, %s5
  %s8 = scalar_select 0, %s7, %s5
  $region1: #{tpu_custom_call.1} parent=0
    #allocation2 [shape = 'u8[8192]{0}', space=vmem, size = 0x2000, scoped, tag = 'output window, operand 0, single buffered']
    #allocation3 [shape = 's32[1]{0}', space=sflag, size = 0x4, scoped, tag = 'scoped memory for tpu_custom_call.1']
    %9 = vsyncpa [#allocation3], 0
    // Predicated region
    $region2: #{tpu_custom_call.1} parent=1 // pred_check
      _
    $region3: #{tpu_custom_call.1} parent=1 // pred_check_branch
      %11 = sbr.rel (0) target = $region5
    $region4: #{tpu_custom_call.1} parent=1 // pred_region
      _
    $region5: #{tpu_custom_call.1} parent=1 // pred_fallthru
      _
    // Predicated region
    $region6: #{tpu_custom_call.1} parent=1 // pred_check
      _
    $region7: #{tpu_custom_call.1} parent=1 // pred_check_branch
      %13 = sbr.rel (0) target = $region9
    $region8: #{tpu_custom_call.1} parent=1 // pred_region
      _
    $region9: #{tpu_custom_call.1} parent=1 // pred_fallthru
      _
    // Predicated region
    $region10: #{tpu_custom_call.1} parent=1 // pred_check
      _
    $region11: #{tpu_custom_call.1} parent=1 // pred_check_branch
      %15 = sbr.rel (0) target = $region13
    $region12: #{tpu_custom_call.1} parent=1 // pred_region
      _
    $region13: #{tpu_custom_call.1} parent=1 // pred_fallthru
      _
    // Predicated region
    $region14: #{tpu_custom_call.1} parent=1 // pred_check
      _
    $region15: #{tpu_custom_call.1} parent=1 // pred_check_branch
      %17 = sbr.rel (0) target = $region17
    $region16: #{tpu_custom_call.1} parent=1 // pred_region
      _
    $region17: #{tpu_custom_call.1} parent=1 // pred_fallthru
      _
    %v18 = vld [vmem:[%s3] sm:$0xff]
    %v19 = vld [vmem:[%s3 + $0x8] sm:$0xff]
    %v20 = vld [vmem:[%s0] sm:$0xff]
    %v21 = vld [vmem:[%s0 + $0x8] sm:$0xff]
    %vm22 = vcmask 130048
    %v23 = vsel %vm22, %v20, -inf
    %24 = vmax.xlane.f32.xlu0 %v23
    %v25 = vpop.xlane.xlu0 %24
    %v26 = vsel %vm22, %v21, -inf
    %27 = vmax.xlane.f32.xlu0 %v26
    %v28 = vpop.xlane.xlu0 %27
    %v29 = vsub.f32 %v20, %v25
    %v30 = vsub.f32 %v21, %v28
    %v31 = vmul.f32 %v29, 1.442695
    %v32 = vpow.pop %v31
    %v33 = vmul.f32 %v30, 1.442695
    %v34 = vpow.pop %v33
    %v35 = vsel %vm22, %v32, 0.0
    %36 = vadd.xlane.f32.xlu0 %v35
    %v37 = vpop.xlane.xlu0 %36
    %v38 = vsel %vm22, %v34, 0.0
    %39 = vadd.xlane.f32.xlu0 %v38
    %v40 = vpop.xlane.xlu0 %39
    %v41 = vld [vmem:[%s1] sm:$0xff]
    %v42 = vld [vmem:[%s1 + $0x8] sm:$0xff]
    %v44 = vsel %vm22, %v32, 0
    %v47 = vsel %vm22, %v34, 0
    %49 = vmatprep.subr.mxu0 0.0
    %50 = vmatpush1.msra.mxu0 0.0
    %51 = vmatprep.subr.mxu0 0.0
    %52 = vmatpush1.msra.mxu0 0.0
    %53 = vmatprep.subr.mxu0 0.0
    %54 = vmatpush1.msra.mxu0 0.0
    %55 = vmatprep.subr.mxu0 0.0
    %56 = vmatpush1.msra.mxu0 0.0
    %57 = vmatprep.subr.mxu0 0.0
    %58 = vmatpush1.msra.mxu0 0.0
    %59 = vmatprep.subr.mxu0 0.0
    %60 = vmatpush1.msra.mxu0 0.0
    %61 = vmatprep.subr.mxu0 0.0
    %62 = vmatpush1.msra.mxu0 0.0
    %63 = vmatprep.subr.mxu0 0.0
    %64 = vmatpush1.msra.mxu0 0.0
    %65 = vmatprep.subr.mxu0 0.0
    %66 = vmatpush1.msra.mxu0 0.0
    %67 = vmatprep.subr.mxu0 0.0
    %68 = vmatpush1.msra.mxu0 0.0
    %69 = vmatprep.subr.mxu0 0.0
    %70 = vmatpush1.msra.mxu0 0.0
    %71 = vmatprep.subr.mxu0 0.0
    %72 = vmatpush1.msra.mxu0 0.0
    %73 = vmatprep.subr.mxu0 0.0
    %74 = vmatpush1.msra.mxu0 0.0
    %75 = vmatprep.subr.mxu0 0.0
    %76 = vmatpush1.msra.mxu0 0.0
    %77 = vmatprep.subr.mxu0 0.0
    %78 = vmatpush1.msra.mxu0 %v42
    %79 = vmatprep.subr.mxu0 0.0
    %80 = vmatpush1.msra.mxu0 %v41
    %81 = vmatprep.subr.mxu0 0.0
    %82 = vmatpush2.msra.mxu0 0.0
    %83 = vmatprep.subr.mxu0 0.0
    %84 = vmatpush2.msra.mxu0 0.0
    %85 = vmatprep.subr.mxu0 0.0
    %86 = vmatpush2.msra.mxu0 0.0
    %87 = vmatprep.subr.mxu0 0.0
    %88 = vmatpush2.msra.mxu0 0.0
    %89 = vmatprep.subr.mxu0 0.0
    %90 = vmatpush2.msra.mxu0 0.0
    %91 = vmatprep.subr.mxu0 0.0
    %92 = vmatpush2.msra.mxu0 0.0
    %93 = vmatprep.subr.mxu0 0.0
    %94 = vmatpush2.msra.mxu0 0.0
    %95 = vmatprep.subr.mxu0 0.0
    %96 = vmatpush2.msra.mxu0 0.0
    %97 = vmatprep.subr.mxu0 0.0
    %98 = vmatpush2.msra.mxu0 0.0
    %99 = vmatprep.subr.mxu0 0.0
    %100 = vmatpush2.msra.mxu0 0.0
    %101 = vmatprep.subr.mxu0 0.0
    %102 = vmatpush2.msra.mxu0 0.0
    %103 = vmatprep.subr.mxu0 0.0
    %104 = vmatpush2.msra.mxu0 0.0
    %105 = vmatprep.subr.mxu0 0.0
    %106 = vmatpush2.msra.mxu0 0.0
    %107 = vmatprep.subr.mxu0 0.0
    %108 = vmatpush2.msra.mxu0 0.0
    %109 = vmatprep.subr.mxu0 0.0
    %110 = vmatpush2.msra.mxu0 0.0
    %111 = vmatprep.subr.mxu0 0.0
    %112 = vmatpush2.msra.mxu0 0.0
    %113 = vmatprep.mubr.f32.mxu0 0.0
    %114 = vmatmul.mubr.f32.gmra.mxu0 %v44
    %v115 = vpop.f32.mrf.mxu0
    %v116 = vadd.f32 0.0, %v115
    %v117 = vpop.f32.mrf.mxu0
    %118 = vmatprep.mubr.f32.mxu0 0.0
    %119 = vmatmul.mubr.f32.gmra.mxu0 %v47
    %v120 = vpop.f32.mrf.mxu0
    %v121 = vadd.f32 0.0, %v120
    %v122 = vpop.f32.mrf.mxu0
    %123 = vdwg.mxu0
    %v124 = vrcp.pop %v37
    %v125 = vrcp.pop %v40
    %v126 = vmul.f32 %v37, %v124
    %v127 = vmul.f32 %v40, %v125
    %v128 = vsub.f32 2.0, %v126
    %v129 = vsub.f32 2.0, %v127
    %v130 = vmul.f32 %v124, %v128
    %v131 = vmul.f32 %v125, %v129
    %v132 = vmul.f32 %v116, %v130
    %v133 = vmul.f32 %v121, %v131
    %v134 = vld [vmem:[%s2] sm:$0xff]
    %v135 = vld [vmem:[%s2 + $0x8] sm:$0xff]
    %v136 = vadd.f32 %v132, %v134
    %v137 = vadd.f32 %v133, %v135
    %s138 = scalar_lea.vmem %s0, 16
    %v139 = vld [vmem:[%s138] sm:$0xff]
    %v140 = vld [vmem:[%s138 + $0x8] sm:$0xff]
    %v141 = vsel %vm22, %v139, -inf
    %142 = vmax.xlane.f32.xlu0 %v141
    %v143 = vpop.xlane.xlu0 %142
    %v144 = vsel %vm22, %v140, -inf
    %145 = vmax.xlane.f32.xlu0 %v144
    %v146 = vpop.xlane.xlu0 %145
    %v147 = vsub.f32 %v139, %v143
    %v148 = vsub.f32 %v140, %v146
    %v149 = vmul.f32 %v147, 1.442695
    %v150 = vpow.pop %v149
    %v151 = vmul.f32 %v148, 1.442695
    %v152 = vpow.pop %v151
    %v153 = vsel %vm22, %v150, 0.0
    %154 = vadd.xlane.f32.xlu0 %v153
    %v155 = vpop.xlane.xlu0 %154
    %v156 = vsel %vm22, %v152, 0.0
    %157 = vadd.xlane.f32.xlu0 %v156
    %v158 = vpop.xlane.xlu0 %157
    %s159 = scalar_lea.vmem %s1, 16
    %v160 = vld [vmem:[%s159] sm:$0xff]
    %v161 = vld [vmem:[%s159 + $0x8] sm:$0xff]
    %v163 = vsel %vm22, %v150, 0
    %v166 = vsel %vm22, %v152, 0
    %168 = vmatprep.subr.mxu0 0.0
    %169 = vmatpush1.msra.mxu0 0.0
    %170 = vmatprep.subr.mxu0 0.0
    %171 = vmatpush1.msra.mxu0 0.0
    %172 = vmatprep.subr.mxu0 0.0
    %173 = vmatpush1.msra.mxu0 0.0
    %174 = vmatprep.subr.mxu0 0.0
    %175 = vmatpush1.msra.mxu0 0.0
    %176 = vmatprep.subr.mxu0 0.0
    %177 = vmatpush1.msra.mxu0 0.0
    %178 = vmatprep.subr.mxu0 0.0
    %179 = vmatpush1.msra.mxu0 0.0
    %180 = vmatprep.subr.mxu0 0.0
    %181 = vmatpush1.msra.mxu0 0.0
    %182 = vmatprep.subr.mxu0 0.0
    %183 = vmatpush1.msra.mxu0 0.0
    %184 = vmatprep.subr.mxu0 0.0
    %185 = vmatpush1.msra.mxu0 0.0
    %186 = vmatprep.subr.mxu0 0.0
    %187 = vmatpush1.msra.mxu0 0.0
    %188 = vmatprep.subr.mxu0 0.0
    %189 = vmatpush1.msra.mxu0 0.0
    %190 = vmatprep.subr.mxu0 0.0
    %191 = vmatpush1.msra.mxu0 0.0
    %192 = vmatprep.subr.mxu0 0.0
    %193 = vmatpush1.msra.mxu0 0.0
    %194 = vmatprep.subr.mxu0 0.0
    %195 = vmatpush1.msra.mxu0 0.0
    %196 = vmatprep.subr.mxu0 0.0
    %197 = vmatpush1.msra.mxu0 %v161
    %198 = vmatprep.subr.mxu0 0.0
    %199 = vmatpush1.msra.mxu0 %v160
    %200 = vmatprep.subr.mxu0 0.0
    %201 = vmatpush2.msra.mxu0 0.0
    %202 = vmatprep.subr.mxu0 0.0
    %203 = vmatpush2.msra.mxu0 0.0
    %204 = vmatprep.subr.mxu0 0.0
    %205 = vmatpush2.msra.mxu0 0.0
    %206 = vmatprep.subr.mxu0 0.0
    %207 = vmatpush2.msra.mxu0 0.0
    %208 = vmatprep.subr.mxu0 0.0
    %209 = vmatpush2.msra.mxu0 0.0
    %210 = vmatprep.subr.mxu0 0.0
    %211 = vmatpush2.msra.mxu0 0.0
    %212 = vmatprep.subr.mxu0 0.0
    %213 = vmatpush2.msra.mxu0 0.0
    %214 = vmatprep.subr.mxu0 0.0
    %215 = vmatpush2.msra.mxu0 0.0
    %216 = vmatprep.subr.mxu0 0.0
    %217 = vmatpush2.msra.mxu0 0.0
    %218 = vmatprep.subr.mxu0 0.0
    %219 = vmatpush2.msra.mxu0 0.0
    %220 = vmatprep.subr.mxu0 0.0
    %221 = vmatpush2.msra.mxu0 0.0
    %222 = vmatprep.subr.mxu0 0.0
    %223 = vmatpush2.msra.mxu0 0.0
    %224 = vmatprep.subr.mxu0 0.0
    %225 = vmatpush2.msra.mxu0 0.0
    %226 = vmatprep.subr.mxu0 0.0
    %227 = vmatpush2.msra.mxu0 0.0
    %228 = vmatprep.subr.mxu0 0.0
    %229 = vmatpush2.msra.mxu0 0.0
    %230 = vmatprep.subr.mxu0 0.0
    %231 = vmatpush2.msra.mxu0 0.0
    %232 = vmatprep.mubr.f32.mxu0 0.0
    %233 = vmatmul.mubr.f32.gmra.mxu0 %v163
    %v234 = vpop.f32.mrf.mxu0
    %v235 = vadd.f32 0.0, %v234
    %v236 = vpop.f32.mrf.mxu0
    %237 = vmatprep.mubr.f32.mxu0 0.0
    %238 = vmatmul.mubr.f32.gmra.mxu0 %v166
    %v239 = vpop.f32.mrf.mxu0
    %v240 = vadd.f32 0.0, %v239
    %v241 = vpop.f32.mrf.mxu0
    %242 = vdwg.mxu0
    %v243 = vrcp.pop %v155
    %v244 = vrcp.pop %v158
    %v245 = vmul.f32 %v155, %v243
    %v246 = vmul.f32 %v158, %v244
    %v247 = vsub.f32 2.0, %v245
    %v248 = vsub.f32 2.0, %v246
    %v249 = vmul.f32 %v243, %v247
    %v250 = vmul.f32 %v244, %v248
    %v251 = vmul.f32 %v235, %v249
    %v252 = vmul.f32 %v240, %v250
    %s253 = scalar_lea.vmem %s2, 16
    %v254 = vld [vmem:[%s253] sm:$0xff]
    %v255 = vld [vmem:[%s253 + $0x8] sm:$0xff]
    %v256 = vadd.f32 %v251, %v254
    %v257 = vadd.f32 %v252, %v255
    %s258 = scalar_lea.vmem %s0, 32
    %v259 = vld [vmem:[%s258] sm:$0xff]
    %v260 = vld [vmem:[%s258 + $0x8] sm:$0xff]
    %v261 = vsel %vm22, %v259, -inf
    %262 = vmax.xlane.f32.xlu0 %v261
    %v263 = vpop.xlane.xlu0 %262
    %v264 = vsel %vm22, %v260, -inf
    %265 = vmax.xlane.f32.xlu0 %v264
    %v266 = vpop.xlane.xlu0 %265
    %v267 = vsub.f32 %v259, %v263
    %v268 = vsub.f32 %v260, %v266
    %v269 = vmul.f32 %v267, 1.442695
    %v270 = vpow.pop %v269
    %v271 = vmul.f32 %v268, 1.442695
    %v272 = vpow.pop %v271
    %v273 = vsel %vm22, %v270, 0.0
    %274 = vadd.xlane.f32.xlu0 %v273
    %v275 = vpop.xlane.xlu0 %274
    %v276 = vsel %vm22, %v272, 0.0
    %277 = vadd.xlane.f32.xlu0 %v276
    %v278 = vpop.xlane.xlu0 %277
    %s279 = scalar_lea.vmem %s1, 32
    %v280 = vld [vmem:[%s279] sm:$0xff]
    %v281 = vld [vmem:[%s279 + $0x8] sm:$0xff]
    %v283 = vsel %vm22, %v270, 0
    %v286 = vsel %vm22, %v272, 0
    %288 = vmatprep.subr.mxu0 0.0
    %289 = vmatpush1.msra.mxu0 0.0
    %290 = vmatprep.subr.mxu0 0.0
    %291 = vmatpush1.msra.mxu0 0.0
    %292 = vmatprep.subr.mxu0 0.0
    %293 = vmatpush1.msra.mxu0 0.0
    %294 = vmatprep.subr.mxu0 0.0
    %295 = vmatpush1.msra.mxu0 0.0
    %296 = vmatprep.subr.mxu0 0.0
    %297 = vmatpush1.msra.mxu0 0.0
    %298 = vmatprep.subr.mxu0 0.0
    %299 = vmatpush1.msra.mxu0 0.0
    %300 = vmatprep.subr.mxu0 0.0
    %301 = vmatpush1.msra.mxu0 0.0
    %302 = vmatprep.subr.mxu0 0.0
    %303 = vmatpush1.msra.mxu0 0.0
    %304 = vmatprep.subr.mxu0 0.0
    %305 = vmatpush1.msra.mxu0 0.0
    %306 = vmatprep.subr.mxu0 0.0
    %307 = vmatpush1.msra.mxu0 0.0
    %308 = vmatprep.subr.mxu0 0.0
    %309 = vmatpush1.msra.mxu0 0.0
    %310 = vmatprep.subr.mxu0 0.0
    %311 = vmatpush1.msra.mxu0 0.0
    %312 = vmatprep.subr.mxu0 0.0
    %313 = vmatpush1.msra.mxu0 0.0
    %314 = vmatprep.subr.mxu0 0.0
    %315 = vmatpush1.msra.mxu0 0.0
    %316 = vmatprep.subr.mxu0 0.0
    %317 = vmatpush1.msra.mxu0 %v281
    %318 = vmatprep.subr.mxu0 0.0
    %319 = vmatpush1.msra.mxu0 %v280
    %320 = vmatprep.subr.mxu0 0.0
    %321 = vmatpush2.msra.mxu0 0.0
    %322 = vmatprep.subr.mxu0 0.0
    %323 = vmatpush2.msra.mxu0 0.0
    %324 = vmatprep.subr.mxu0 0.0
    %325 = vmatpush2.msra.mxu0 0.0
    %326 = vmatprep.subr.mxu0 0.0
    %327 = vmatpush2.msra.mxu0 0.0
    %328 = vmatprep.subr.mxu0 0.0
    %329 = vmatpush2.msra.mxu0 0.0
    %330 = vmatprep.subr.mxu0 0.0
    %331 = vmatpush2.msra.mxu0 0.0
    %332 = vmatprep.subr.mxu0 0.0
    %333 = vmatpush2.msra.mxu0 0.0
    %334 = vmatprep.subr.mxu0 0.0
    %335 = vmatpush2.msra.mxu0 0.0
    %336 = vmatprep.subr.mxu0 0.0
    %337 = vmatpush2.msra.mxu0 0.0
    %338 = vmatprep.subr.mxu0 0.0
    %339 = vmatpush2.msra.mxu0 0.0
    %340 = vmatprep.subr.mxu0 0.0
    %341 = vmatpush2.msra.mxu0 0.0
    %342 = vmatprep.subr.mxu0 0.0
    %343 = vmatpush2.msra.mxu0 0.0
    %344 = vmatprep.subr.mxu0 0.0
    %345 = vmatpush2.msra.mxu0 0.0
    %346 = vmatprep.subr.mxu0 0.0
    %347 = vmatpush2.msra.mxu0 0.0
    %348 = vmatprep.subr.mxu0 0.0
    %349 = vmatpush2.msra.mxu0 0.0
    %350 = vmatprep.subr.mxu0 0.0
    %351 = vmatpush2.msra.mxu0 0.0
    %352 = vmatprep.mubr.f32.mxu0 0.0
    %353 = vmatmul.mubr.f32.gmra.mxu0 %v283
    %v354 = vpop.f32.mrf.mxu0
    %v355 = vadd.f32 0.0, %v354
    %v356 = vpop.f32.mrf.mxu0
    %357 = vmatprep.mubr.f32.mxu0 0.0
    %358 = vmatmul.mubr.f32.gmra.mxu0 %v286
    %v359 = vpop.f32.mrf.mxu0
    %v360 = vadd.f32 0.0, %v359
    %v361 = vpop.f32.mrf.mxu0
    %362 = vdwg.mxu0
    %v363 = vrcp.pop %v275
    %v364 = vrcp.pop %v278
    %v365 = vmul.f32 %v275, %v363
    %v366 = vmul.f32 %v278, %v364
    %v367 = vsub.f32 2.0, %v365
    %v368 = vsub.f32 2.0, %v366
    %v369 = vmul.f32 %v363, %v367
    %v370 = vmul.f32 %v364, %v368
    %v371 = vmul.f32 %v355, %v369
    %v372 = vmul.f32 %v360, %v370
    %s373 = scalar_lea.vmem %s2, 32
    %v374 = vld [vmem:[%s373] sm:$0xff]
    %v375 = vld [vmem:[%s373 + $0x8] sm:$0xff]
    %v376 = vadd.f32 %v371, %v374
    %v377 = vadd.f32 %v372, %v375
    %380 = vrot.lane.b32.xlu0 %v136, 8
    %v381 = vpop.permute.xlu0 %380
    %382 = vrot.lane.b32.xlu0 %v137, 8
    %v383 = vpop.permute.xlu0 %382
    %388 = vrot.lane.b32.xlu0 %v256, 16
    %v389 = vpop.permute.xlu0 %388
    %390 = vrot.lane.b32.xlu0 %v257, 16
    %v391 = vpop.permute.xlu0 %390
    %396 = vrot.lane.b32.xlu0 %v376, 24
    %v397 = vpop.permute.xlu0 %396
    %398 = vrot.lane.b32.xlu0 %v377, 24
    %v399 = vpop.permute.xlu0 %398
    %vm402 = vcmask 64512
    %v403 = vsel %vm402, %v18, %v381
    %v404 = vsel %vm402, %v19, %v383
    %v405 = vsel %vm22, %v403, %v389
    %v406 = vsel %vm22, %v404, %v391
    %vm407 = vcmask 195584
    %v408 = vsel %vm407, %v405, %v397
    %v409 = vsel %vm407, %v406, %v399
    %vm410 = vcmask 261120
    %411 = vst.msk [vmem:[#allocation2] sm:$0xff] %vm410, %v408
    %412 = vst.msk [vmem:[#allocation2 + $0x8] sm:$0xff] %vm410, %v409
    // Predicated region
    $region18: #{tpu_custom_call.1} parent=1 // pred_check
      _
    $region19: #{tpu_custom_call.1} parent=1 // pred_check_branch
      %414 = sbr.rel (0) target = $region21
    $region20: #{tpu_custom_call.1} parent=1 // pred_region
      %s416 = ssub.s32 256, 256
      %417 = vsyncadd [#allocation3], %s416
      %s418 = sshll.u32 [#allocation2], 4
      %s419 = int_to_ptr.vmem [resolvable:$true] %s418
      %424 = dma.vmem_to_hbm [thread:$0]  %s419, 256, %s4, [#allocation3], 128, 128, 8
    $region21: #{tpu_custom_call.1} parent=1 // pred_fallthru
      _
    // Predicated region
    $region22: #{tpu_custom_call.1} parent=1 // pred_check
      _
    $region23: #{tpu_custom_call.1} parent=1 // pred_check_branch
      %426 = sbr.rel (0) target = $region25
    $region24: #{tpu_custom_call.1} parent=1 // pred_region
      %427 = dma.done [#allocation3], 256
    $region25: #{tpu_custom_call.1} parent=1 // pred_fallthru
      _
    %428 = vsyncpa [#allocation3], 1

// kernel: tpu_custom_call.1
$region0: #{tpu_custom_call.1}
  #allocation0 [shape = 'u32[]', space=smem, size = 0x4, offset = 0x4, fixed_abs, tag = 'smem constant byte address 0x4 - core index']
  #allocation1 [shape = 'u32[144,128]{1,0:T(1,128)}', space=vmem, size = 0x12000, scoped, tag = 'internal scratch']
  %s0 = inlined_call_operand.vmem [shape: f32[3,16,16], index: 0, kind: input, shape index: {}]
  %s1 = inlined_call_operand.vmem [shape: f32[3,16,8], index: 1, kind: input, shape index: {}]
  %s2 = inlined_call_operand.vmem [shape: f32[3,16,8], index: 2, kind: input, shape index: {}]
  %s3 = inlined_call_operand.vmem [shape: f32[16,8], index: 3, kind: input, shape index: {}]
  %s4 = inlined_call_operand.hbm [shape: f32[16,32], index: 4, kind: output, shape index: {}]
  %s5 = sld [smem:[#allocation0]]
  $region26: #{tpu_custom_call.1} parent=0
    _
  %s7 = ssub.s32 1, %s5
  %s8 = scalar_select 0, %s7, %s5
  $region1: #{tpu_custom_call.1} parent=0
    #allocation2 [shape = 'u8[8192]{0}', space=vmem, size = 0x2000, scoped, tag = 'output window, operand 0, single buffered']
    #allocation3 [shape = 's32[1]{0}', space=sflag, size = 0x4, scoped, tag = 'scoped memory for tpu_custom_call.1']
    %9 = vsyncpa [#allocation3], 0
    // Predicated region
    $region2: #{tpu_custom_call.1} parent=1 // pred_check
      _
    $region3: #{tpu_custom_call.1} parent=1 // pred_check_branch
      %11 = sbr.rel (0) target = $region5
    $region4: #{tpu_custom_call.1} parent=1 // pred_region
      _
    $region5: #{tpu_custom_call.1} parent=1 // pred_fallthru
      _
    // Predicated region
    $region6: #{tpu_custom_call.1} parent=1 // pred_check
      _
    $region7: #{tpu_custom_call.1} parent=1 // pred_check_branch
      %13 = sbr.rel (0) target = $region9
    $region8: #{tpu_custom_call.1} parent=1 // pred_region
      _
    $region9: #{tpu_custom_call.1} parent=1 // pred_fallthru
      _
    // Predicated region
    $region10: #{tpu_custom_call.1} parent=1 // pred_check
      _
    $region11: #{tpu_custom_call.1} parent=1 // pred_check_branch
      %15 = sbr.rel (0) target = $region13
    $region12: #{tpu_custom_call.1} parent=1 // pred_region
      _
    $region13: #{tpu_custom_call.1} parent=1 // pred_fallthru
      _
    // Predicated region
    $region14: #{tpu_custom_call.1} parent=1 // pred_check
      _
    $region15: #{tpu_custom_call.1} parent=1 // pred_check_branch
      %17 = sbr.rel (0) target = $region17
    $region16: #{tpu_custom_call.1} parent=1 // pred_region
      _
    $region17: #{tpu_custom_call.1} parent=1 // pred_fallthru
      _
    %v18 = vld [vmem:[%s3] sm:$0xff]
    %v19 = vld [vmem:[%s3 + $0x8] sm:$0xff]
    %v20 = vld [vmem:[%s0] sm:$0xff]
    %v21 = vld [vmem:[%s0 + $0x8] sm:$0xff]
    %vm22 = vcmask 130048
    %v23 = vsel %vm22, %v20, -inf
    %24 = vmax.xlane.f32.xlu0 %v23
    %v25 = vpop.xlane.xlu0 %24
    %v26 = vsel %vm22, %v21, -inf
    %27 = vmax.xlane.f32.xlu0 %v26
    %v28 = vpop.xlane.xlu0 %27
    %v29 = vsub.f32 %v20, %v25
    %v30 = vsub.f32 %v21, %v28
    %v31 = vmul.f32 %v29, 1.442695
    %v32 = vpow.pop %v31
    %v33 = vmul.f32 %v30, 1.442695
    %v34 = vpow.pop %v33
    %v35 = vsel %vm22, %v32, 0.0
    %36 = vadd.xlane.f32.xlu0 %v35
    %v37 = vpop.xlane.xlu0 %36
    %v38 = vsel %vm22, %v34, 0.0
    %39 = vadd.xlane.f32.xlu0 %v38
    %v40 = vpop.xlane.xlu0 %39
    %v41 = vld [vmem:[%s1] sm:$0xff]
    %v42 = vld [vmem:[%s1 + $0x8] sm:$0xff]
    %v44 = vsel %vm22, %v32, 0
    %v47 = vsel %vm22, %v34, 0
    %49 = vmatprep.subr.mxu0 0.0
    %50 = vmatpush1.msra.mxu0 0.0
    %51 = vmatprep.subr.mxu0 0.0
    %52 = vmatpush1.msra.mxu0 0.0
    %53 = vmatprep.subr.mxu0 0.0
    %54 = vmatpush1.msra.mxu0 0.0
    %55 = vmatprep.subr.mxu0 0.0
    %56 = vmatpush1.msra.mxu0 0.0
    %57 = vmatprep.subr.mxu0 0.0
    %58 = vmatpush1.msra.mxu0 0.0
    %59 = vmatprep.subr.mxu0 0.0
    %60 = vmatpush1.msra.mxu0 0.0
    %61 = vmatprep.subr.mxu0 0.0
    %62 = vmatpush1.msra.mxu0 0.0
    %63 = vmatprep.subr.mxu0 0.0
    %64 = vmatpush1.msra.mxu0 0.0
    %65 = vmatprep.subr.mxu0 0.0
    %66 = vmatpush1.msra.mxu0 0.0
    %67 = vmatprep.subr.mxu0 0.0
    %68 = vmatpush1.msra.mxu0 0.0
    %69 = vmatprep.subr.mxu0 0.0
    %70 = vmatpush1.msra.mxu0 0.0
    %71 = vmatprep.subr.mxu0 0.0
    %72 = vmatpush1.msra.mxu0 0.0
    %73 = vmatprep.subr.mxu0 0.0
    %74 = vmatpush1.msra.mxu0 0.0
    %75 = vmatprep.subr.mxu0 0.0
    %76 = vmatpush1.msra.mxu0 0.0
    %77 = vmatprep.subr.mxu0 0.0
    %78 = vmatpush1.msra.mxu0 %v42
    %79 = vmatprep.subr.mxu0 0.0
    %80 = vmatpush1.msra.mxu0 %v41
    %81 = vmatprep.subr.mxu0 0.0
    %82 = vmatpush2.msra.mxu0 0.0
    %83 = vmatprep.subr.mxu0 0.0
    %84 = vmatpush2.msra.mxu0 0.0
    %85 = vmatprep.subr.mxu0 0.0
    %86 = vmatpush2.msra.mxu0 0.0
    %87 = vmatprep.subr.mxu0 0.0
    %88 = vmatpush2.msra.mxu0 0.0
    %89 = vmatprep.subr.mxu0 0.0
    %90 = vmatpush2.msra.mxu0 0.0
    %91 = vmatprep.subr.mxu0 0.0
    %92 = vmatpush2.msra.mxu0 0.0
    %93 = vmatprep.subr.mxu0 0.0
    %94 = vmatpush2.msra.mxu0 0.0
    %95 = vmatprep.subr.mxu0 0.0
    %96 = vmatpush2.msra.mxu0 0.0
    %97 = vmatprep.subr.mxu0 0.0
    %98 = vmatpush2.msra.mxu0 0.0
    %99 = vmatprep.subr.mxu0 0.0
    %100 = vmatpush2.msra.mxu0 0.0
    %101 = vmatprep.subr.mxu0 0.0
    %102 = vmatpush2.msra.mxu0 0.0
    %103 = vmatprep.subr.mxu0 0.0
    %104 = vmatpush2.msra.mxu0 0.0
    %105 = vmatprep.subr.mxu0 0.0
    %106 = vmatpush2.msra.mxu0 0.0
    %107 = vmatprep.subr.mxu0 0.0
    %108 = vmatpush2.msra.mxu0 0.0
    %109 = vmatprep.subr.mxu0 0.0
    %110 = vmatpush2.msra.mxu0 0.0
    %111 = vmatprep.subr.mxu0 0.0
    %112 = vmatpush2.msra.mxu0 0.0
    %113 = vmatprep.mubr.f32.mxu0 0.0
    %114 = vmatmul.mubr.f32.gmra.mxu0 %v44
    %v115 = vpop.f32.mrf.mxu0
    %v116 = vadd.f32 0.0, %v115
    %v117 = vpop.f32.mrf.mxu0
    %118 = vmatprep.mubr.f32.mxu0 0.0
    %119 = vmatmul.mubr.f32.gmra.mxu0 %v47
    %v120 = vpop.f32.mrf.mxu0
    %v121 = vadd.f32 0.0, %v120
    %v122 = vpop.f32.mrf.mxu0
    %123 = vdwg.mxu0
    %v124 = vrcp.pop %v37
    %v125 = vrcp.pop %v40
    %v126 = vmul.f32 %v37, %v124
    %v127 = vmul.f32 %v40, %v125
    %v128 = vsub.f32 2.0, %v126
    %v129 = vsub.f32 2.0, %v127
    %v130 = vmul.f32 %v124, %v128
    %v131 = vmul.f32 %v125, %v129
    %v132 = vmul.f32 %v116, %v130
    %v133 = vmul.f32 %v121, %v131
    %v134 = vld [vmem:[%s2] sm:$0xff]
    %v135 = vld [vmem:[%s2 + $0x8] sm:$0xff]
    %v136 = vadd.f32 %v132, %v134
    %v137 = vadd.f32 %v133, %v135
    %s138 = scalar_lea.vmem %s0, 16
    %v139 = vld [vmem:[%s138] sm:$0xff]
    %v140 = vld [vmem:[%s138 + $0x8] sm:$0xff]
    %v141 = vsel %vm22, %v139, -inf
    %142 = vmax.xlane.f32.xlu0 %v141
    %v143 = vpop.xlane.xlu0 %142
    %v144 = vsel %vm22, %v140, -inf
    %145 = vmax.xlane.f32.xlu0 %v144
    %v146 = vpop.xlane.xlu0 %145
    %v147 = vsub.f32 %v139, %v143
    %v148 = vsub.f32 %v140, %v146
    %v149 = vmul.f32 %v147, 1.442695
    %v150 = vpow.pop %v149
    %v151 = vmul.f32 %v148, 1.442695
    %v152 = vpow.pop %v151
    %v153 = vsel %vm22, %v150, 0.0
    %154 = vadd.xlane.f32.xlu0 %v153
    %v155 = vpop.xlane.xlu0 %154
    %v156 = vsel %vm22, %v152, 0.0
    %157 = vadd.xlane.f32.xlu0 %v156
    %v158 = vpop.xlane.xlu0 %157
    %s159 = scalar_lea.vmem %s1, 16
    %v160 = vld [vmem:[%s159] sm:$0xff]
    %v161 = vld [vmem:[%s159 + $0x8] sm:$0xff]
    %v163 = vsel %vm22, %v150, 0
    %v166 = vsel %vm22, %v152, 0
    %168 = vmatprep.subr.mxu0 0.0
    %169 = vmatpush1.msra.mxu0 0.0
    %170 = vmatprep.subr.mxu0 0.0
    %171 = vmatpush1.msra.mxu0 0.0
    %172 = vmatprep.subr.mxu0 0.0
    %173 = vmatpush1.msra.mxu0 0.0
    %174 = vmatprep.subr.mxu0 0.0
    %175 = vmatpush1.msra.mxu0 0.0
    %176 = vmatprep.subr.mxu0 0.0
    %177 = vmatpush1.msra.mxu0 0.0
    %178 = vmatprep.subr.mxu0 0.0
    %179 = vmatpush1.msra.mxu0 0.0
    %180 = vmatprep.subr.mxu0 0.0
    %181 = vmatpush1.msra.mxu0 0.0
    %182 = vmatprep.subr.mxu0 0.0
    %183 = vmatpush1.msra.mxu0 0.0
    %184 = vmatprep.subr.mxu0 0.0
    %185 = vmatpush1.msra.mxu0 0.0
    %186 = vmatprep.subr.mxu0 0.0
    %187 = vmatpush1.msra.mxu0 0.0
    %188 = vmatprep.subr.mxu0 0.0
    %189 = vmatpush1.msra.mxu0 0.0
    %190 = vmatprep.subr.mxu0 0.0
    %191 = vmatpush1.msra.mxu0 0.0
    %192 = vmatprep.subr.mxu0 0.0
    %193 = vmatpush1.msra.mxu0 0.0
    %194 = vmatprep.subr.mxu0 0.0
    %195 = vmatpush1.msra.mxu0 0.0
    %196 = vmatprep.subr.mxu0 0.0
    %197 = vmatpush1.msra.mxu0 %v161
    %198 = vmatprep.subr.mxu0 0.0
    %199 = vmatpush1.msra.mxu0 %v160
    %200 = vmatprep.subr.mxu0 0.0
    %201 = vmatpush2.msra.mxu0 0.0
    %202 = vmatprep.subr.mxu0 0.0
    %203 = vmatpush2.msra.mxu0 0.0
    %204 = vmatprep.subr.mxu0 0.0
    %205 = vmatpush2.msra.mxu0 0.0
    %206 = vmatprep.subr.mxu0 0.0
    %207 = vmatpush2.msra.mxu0 0.0
    %208 = vmatprep.subr.mxu0 0.0
    %209 = vmatpush2.msra.mxu0 0.0
    %210 = vmatprep.subr.mxu0 0.0
    %211 = vmatpush2.msra.mxu0 0.0
    %212 = vmatprep.subr.mxu0 0.0
    %213 = vmatpush2.msra.mxu0 0.0
    %214 = vmatprep.subr.mxu0 0.0
    %215 = vmatpush2.msra.mxu0 0.0
    %216 = vmatprep.subr.mxu0 0.0
    %217 = vmatpush2.msra.mxu0 0.0
    %218 = vmatprep.subr.mxu0 0.0
    %219 = vmatpush2.msra.mxu0 0.0
    %220 = vmatprep.subr.mxu0 0.0
    %221 = vmatpush2.msra.mxu0 0.0
    %222 = vmatprep.subr.mxu0 0.0
    %223 = vmatpush2.msra.mxu0 0.0
    %224 = vmatprep.subr.mxu0 0.0
    %225 = vmatpush2.msra.mxu0 0.0
    %226 = vmatprep.subr.mxu0 0.0
    %227 = vmatpush2.msra.mxu0 0.0
    %228 = vmatprep.subr.mxu0 0.0
    %229 = vmatpush2.msra.mxu0 0.0
    %230 = vmatprep.subr.mxu0 0.0
    %231 = vmatpush2.msra.mxu0 0.0
    %232 = vmatprep.mubr.f32.mxu0 0.0
    %233 = vmatmul.mubr.f32.gmra.mxu0 %v163
    %v234 = vpop.f32.mrf.mxu0
    %v235 = vadd.f32 0.0, %v234
    %v236 = vpop.f32.mrf.mxu0
    %237 = vmatprep.mubr.f32.mxu0 0.0
    %238 = vmatmul.mubr.f32.gmra.mxu0 %v166
    %v239 = vpop.f32.mrf.mxu0
    %v240 = vadd.f32 0.0, %v239
    %v241 = vpop.f32.mrf.mxu0
    %242 = vdwg.mxu0
    %v243 = vrcp.pop %v155
    %v244 = vrcp.pop %v158
    %v245 = vmul.f32 %v155, %v243
    %v246 = vmul.f32 %v158, %v244
    %v247 = vsub.f32 2.0, %v245
    %v248 = vsub.f32 2.0, %v246
    %v249 = vmul.f32 %v243, %v247
    %v250 = vmul.f32 %v244, %v248
    %v251 = vmul.f32 %v235, %v249
    %v252 = vmul.f32 %v240, %v250
    %s253 = scalar_lea.vmem %s2, 16
    %v254 = vld [vmem:[%s253] sm:$0xff]
    %v255 = vld [vmem:[%s253 + $0x8] sm:$0xff]
    %v256 = vadd.f32 %v251, %v254
    %v257 = vadd.f32 %v252, %v255
    %s258 = scalar_lea.vmem %s0, 32
    %v259 = vld [vmem:[%s258] sm:$0xff]
    %v260 = vld [vmem:[%s258 + $0x8] sm:$0xff]
    %v261 = vsel %vm22, %v259, -inf
    %262 = vmax.xlane.f32.xlu0 %v261
    %v263 = vpop.xlane.xlu0 %262
    %v264 = vsel %vm22, %v260, -inf
    %265 = vmax.xlane.f32.xlu0 %v264
    %v266 = vpop.xlane.xlu0 %265
    %v267 = vsub.f32 %v259, %v263
    %v268 = vsub.f32 %v260, %v266
    %v269 = vmul.f32 %v267, 1.442695
    %v270 = vpow.pop %v269
    %v271 = vmul.f32 %v268, 1.442695
    %v272 = vpow.pop %v271
    %v273 = vsel %vm22, %v270, 0.0
    %274 = vadd.xlane.f32.xlu0 %v273
    %v275 = vpop.xlane.xlu0 %274
    %v276 = vsel %vm22, %v272, 0.0
    %277 = vadd.xlane.f32.xlu0 %v276
    %v278 = vpop.xlane.xlu0 %277
    %s279 = scalar_lea.vmem %s1, 32
    %v280 = vld [vmem:[%s279] sm:$0xff]
    %v281 = vld [vmem:[%s279 + $0x8] sm:$0xff]
    %v283 = vsel %vm22, %v270, 0
    %v286 = vsel %vm22, %v272, 0
    %288 = vmatprep.subr.mxu0 0.0
    %289 = vmatpush1.msra.mxu0 0.0
    %290 = vmatprep.subr.mxu0 0.0
    %291 = vmatpush1.msra.mxu0 0.0
    %292 = vmatprep.subr.mxu0 0.0
    %293 = vmatpush1.msra.mxu0 0.0
    %294 = vmatprep.subr.mxu0 0.0
    %295 = vmatpush1.msra.mxu0 0.0
    %296 = vmatprep.subr.mxu0 0.0
    %297 = vmatpush1.msra.mxu0 0.0
    %298 = vmatprep.subr.mxu0 0.0
    %299 = vmatpush1.msra.mxu0 0.0
    %300 = vmatprep.subr.mxu0 0.0
    %301 = vmatpush1.msra.mxu0 0.0
    %302 = vmatprep.subr.mxu0 0.0
    %303 = vmatpush1.msra.mxu0 0.0
    %304 = vmatprep.subr.mxu0 0.0
    %305 = vmatpush1.msra.mxu0 0.0
    %306 = vmatprep.subr.mxu0 0.0
    %307 = vmatpush1.msra.mxu0 0.0
    %308 = vmatprep.subr.mxu0 0.0
    %309 = vmatpush1.msra.mxu0 0.0
    %310 = vmatprep.subr.mxu0 0.0
    %311 = vmatpush1.msra.mxu0 0.0
    %312 = vmatprep.subr.mxu0 0.0
    %313 = vmatpush1.msra.mxu0 0.0
    %314 = vmatprep.subr.mxu0 0.0
    %315 = vmatpush1.msra.mxu0 0.0
    %316 = vmatprep.subr.mxu0 0.0
    %317 = vmatpush1.msra.mxu0 %v281
    %318 = vmatprep.subr.mxu0 0.0
    %319 = vmatpush1.msra.mxu0 %v280
    %320 = vmatprep.subr.mxu0 0.0
    %321 = vmatpush2.msra.mxu0 0.0
    %322 = vmatprep.subr.mxu0 0.0
    %323 = vmatpush2.msra.mxu0 0.0
    %324 = vmatprep.subr.mxu0 0.0
    %325 = vmatpush2.msra.mxu0 0.0
    %326 = vmatprep.subr.mxu0 0.0
    %327 = vmatpush2.msra.mxu0 0.0
    %328 = vmatprep.subr.mxu0 0.0
    %329 = vmatpush2.msra.mxu0 0.0
    %330 = vmatprep.subr.mxu0 0.0
    %331 = vmatpush2.msra.mxu0 0.0
    %332 = vmatprep.subr.mxu0 0.0
    %333 = vmatpush2.msra.mxu0 0.0
    %334 = vmatprep.subr.mxu0 0.0
    %335 = vmatpush2.msra.mxu0 0.0
    %336 = vmatprep.subr.mxu0 0.0
    %337 = vmatpush2.msra.mxu0 0.0
    %338 = vmatprep.subr.mxu0 0.0
    %339 = vmatpush2.msra.mxu0 0.0
    %340 = vmatprep.subr.mxu0 0.0
    %341 = vmatpush2.msra.mxu0 0.0
    %342 = vmatprep.subr.mxu0 0.0
    %343 = vmatpush2.msra.mxu0 0.0
    %344 = vmatprep.subr.mxu0 0.0
    %345 = vmatpush2.msra.mxu0 0.0
    %346 = vmatprep.subr.mxu0 0.0
    %347 = vmatpush2.msra.mxu0 0.0
    %348 = vmatprep.subr.mxu0 0.0
    %349 = vmatpush2.msra.mxu0 0.0
    %350 = vmatprep.subr.mxu0 0.0
    %351 = vmatpush2.msra.mxu0 0.0
    %352 = vmatprep.mubr.f32.mxu0 0.0
    %353 = vmatmul.mubr.f32.gmra.mxu0 %v283
    %v354 = vpop.f32.mrf.mxu0
    %v355 = vadd.f32 0.0, %v354
    %v356 = vpop.f32.mrf.mxu0
    %357 = vmatprep.mubr.f32.mxu0 0.0
    %358 = vmatmul.mubr.f32.gmra.mxu0 %v286
    %v359 = vpop.f32.mrf.mxu0
    %v360 = vadd.f32 0.0, %v359
    %v361 = vpop.f32.mrf.mxu0
    %362 = vdwg.mxu0
    %v363 = vrcp.pop %v275
    %v364 = vrcp.pop %v278
    %v365 = vmul.f32 %v275, %v363
    %v366 = vmul.f32 %v278, %v364
    %v367 = vsub.f32 2.0, %v365
    %v368 = vsub.f32 2.0, %v366
    %v369 = vmul.f32 %v363, %v367
    %v370 = vmul.f32 %v364, %v368
    %v371 = vmul.f32 %v355, %v369
    %v372 = vmul.f32 %v360, %v370
    %s373 = scalar_lea.vmem %s2, 32
    %v374 = vld [vmem:[%s373] sm:$0xff]
    %v375 = vld [vmem:[%s373 + $0x8] sm:$0xff]
    %v376 = vadd.f32 %v371, %v374
    %v377 = vadd.f32 %v372, %v375
    %380 = vrot.lane.b32.xlu0 %v136, 8
    %v381 = vpop.permute.xlu0 %380
    %382 = vrot.lane.b32.xlu0 %v137, 8
    %v383 = vpop.permute.xlu0 %382
    %388 = vrot.lane.b32.xlu0 %v256, 16
    %v389 = vpop.permute.xlu0 %388
    %390 = vrot.lane.b32.xlu0 %v257, 16
    %v391 = vpop.permute.xlu0 %390
    %396 = vrot.lane.b32.xlu0 %v376, 24
    %v397 = vpop.permute.xlu0 %396
    %398 = vrot.lane.b32.xlu0 %v377, 24
    %v399 = vpop.permute.xlu0 %398
    %vm402 = vcmask 64512
    %v403 = vsel %vm402, %v18, %v381
    %v404 = vsel %vm402, %v19, %v383
    %v405 = vsel %vm22, %v403, %v389
    %v406 = vsel %vm22, %v404, %v391
    %vm407 = vcmask 195584
    %v408 = vsel %vm407, %v405, %v397
    %v409 = vsel %vm407, %v406, %v399
    %vm410 = vcmask 261120
    %411 = vst.msk [vmem:[#allocation2] sm:$0xff] %vm410, %v408
    %412 = vst.msk [vmem:[#allocation2 + $0x8] sm:$0xff] %vm410, %v409
    // Predicated region
    $region18: #{tpu_custom_call.1} parent=1 // pred_check
      _
    $region19: #{tpu_custom_call.1} parent=1 // pred_check_branch
      %414 = sbr.rel (0) target = $region21
    $region20: #{tpu_custom_call.1} parent=1 // pred_region
      %s416 = ssub.s32 256, 256
      %417 = vsyncadd [#allocation3], %s416
      %s418 = sshll.u32 [#allocation2], 4
      %s419 = int_to_ptr.vmem [resolvable:$true] %s418
      %424 = dma.vmem_to_hbm [thread:$0]  %s419, 256, %s4, [#allocation3], 128, 128, 8
    $region21: #{tpu_custom_call.1} parent=1 // pred_fallthru
      _
    // Predicated region
    $region22: #{tpu_custom_call.1} parent=1 // pred_check
      _
    $region23: #{tpu_custom_call.1} parent=1 // pred_check_branch
      %426 = sbr.rel (0) target = $region25
    $region24: #{tpu_custom_call.1} parent=1 // pred_region
      %427 = dma.done [#allocation3], 256
    $region25: #{tpu_custom_call.1} parent=1 // pred_fallthru
      _
    %428 = vsyncpa [#allocation3], 1

</llo_original>
